<compile_context>
chip_gen: v7x
topology: tpu7x:2x2x1
jax: 0.10.0
libtpu: 0.0.40
codegen_flags: <defaults>
</compile_context>

<pallas_src>
import functools
import math

import jax
import jax.numpy as jnp
from jax.experimental import pallas as pl
from jax.experimental.pallas import tpu as pltpu


ACT_DTYPE = jnp.bfloat16            # activation / weight compute dtype (f32 accum)
_INV_SQRT2 = 1.0 / math.sqrt(2.0)


# ------------------------ generation-aware sizing ------------------------

def _detect_vmem_bytes():
    """Physical VMEM per core; conservative 64 MiB fallback (v7x-safe)."""
    default = 64 * 1024 * 1024
    try:
        info = pltpu.get_tpu_info()
    except Exception:
        return default
    for attr in ("vmem_capacity_bytes", "vmem_size_bytes", "vmem_bytes"):
        val = getattr(info, attr, None)
        try:
            if val is not None and int(val) > 0:
                return int(val)
        except (TypeError, ValueError):
            pass
    return default


_PHYS_VMEM = _detect_vmem_bytes()
_LARGE_VMEM = _PHYS_VMEM >= 96 * 1024 * 1024          # v5e / v6e (128 MiB parts)
VMEM_LIMIT = min(int(_PHYS_VMEM * 3 // 4), 112 * 1024 * 1024)
_BM_CAP = 1024 if _LARGE_VMEM else 512
_MM_BN_CAP = 1024 if _LARGE_VMEM else 512
_MM_BK_CAP = 1024 if _LARGE_VMEM else 512
_ATTN_TILE = 512 if _LARGE_VMEM else 256
_RESIZE_OUT = 768
_RESIZE_ROW_TILE = 384                                 # 2 row tiles per plane


# ----------------------------- small helpers -----------------------------

def _round_up(x, m):
    return ((x + m - 1) // m) * m


def _pick_bm(m):
    """Row tile; prefer >=2 grid steps so both v7x TCs / the pipeline stay busy."""
    for bm in (1024, 512, 384, 256, 128, 64, 32, 16, 8):
        if bm <= _BM_CAP and m % bm == 0 and m // bm >= 2:
            return bm
    return m


def _pick_bn(n, cap):
    """Column (or K) tile: multiple of 128 dividing n, else the full dim."""
    if n <= cap or n % 128 != 0:
        return n
    for bn in range(cap, 127, -128):
        if n % bn == 0:
            return bn
    return n


def _attn_tile(s_pad):
    for t in (_ATTN_TILE, 256, 128):
        if s_pad > t and s_pad % t == 0:
            return t
    return s_pad


def _erf(x):
    # Abramowitz & Stegun 7.1.26 polynomial erf (max abs err ~1.5e-7); the
    # divide goes to the EUP via pl.reciprocal (bf16-level accuracy is ample).
    a1, a2, a3, a4, a5 = (0.254829592, -0.284496736, 1.421413741,
                          -1.453152027, 1.061405429)
    p = 0.3275911
    s = jnp.where(x < 0.0, -1.0, 1.0)
    ax = jnp.abs(x)
    t = pl.reciprocal(1.0 + p * ax, approx=True)
    poly = ((((a5 * t + a4) * t + a3) * t + a2) * t + a1) * t
    return s * (1.0 - poly * jnp.exp(-ax * ax))


def _gelu_exact(x):
    # nn.GELU() default (erf formulation)
    return 0.5 * x * (1.0 + _erf(x * _INV_SQRT2))


def _pad_rows(x2d, m_pad):
    m = x2d.shape[0]
    if m_pad != m:
        x2d = jnp.pad(x2d, ((0, m_pad - m), (0, 0)))
    return x2d


def pad_seq(x):
    """Pad the token axis to a multiple of 8 (<=512 tokens) or 256 (longer)."""
    b, s, d = x.shape
    mult = 8 if s <= 512 else 256
    s_pad = _round_up(s, mult)
    if s_pad != s:
        x = jnp.pad(x, ((0, 0), (0, s_pad - s), (0, 0)))
    return x, s_pad


# ----------------------------- Pallas kernels -----------------------------

def _ln_matmul_kernel(x_ref, g_ref, b_ref, w_ref, bias_ref, o_ref, y_scr, *,
                      eps, activation):
    """Fused LayerNorm (f32 stats) + matmul (+bias, +GELU).

    The normalized block is computed once per row tile (j == 0) into a bf16
    VMEM scratch and reused for all N tiles (N axis is 'arbitrary')."""
    j = pl.program_id(1)

    @pl.when(j == 0)
    def _normalize():
        x = x_ref[...].astype(jnp.float32)
        mu = jnp.mean(x, axis=-1, keepdims=True)
        xc = x - mu
        var = jnp.mean(xc * xc, axis=-1, keepdims=True)
        y = xc * jax.lax.rsqrt(var + eps) * g_ref[...] + b_ref[...]
        y_scr[...] = y.astype(y_scr.dtype)

    acc = jnp.dot(y_scr[...], w_ref[...], preferred_element_type=jnp.float32)
    acc = acc + bias_ref[...]
    if activation == "gelu":
        acc = _gelu_exact(acc)
    o_ref[...] = acc.astype(o_ref.dtype)


def ln_matmul(x, ln_w, ln_b, w, bias, activation="none", out_dtype=None,
              eps=1e-5):
    m, k = x.shape
    n = w.shape[1]
    out_dtype = out_dtype or ACT_DTYPE
    m_pad = _round_up(m, 8)
    x = _pad_rows(x, m_pad)
    bm = _pick_bm(m_pad)
    bn = _pick_bn(n, 1024)
    out = pl.pallas_call(
        functools.partial(_ln_matmul_kernel, eps=eps, activation=activation),
        out_shape=jax.ShapeDtypeStruct((m_pad, n), out_dtype),
        grid=(m_pad // bm, n // bn),
        in_specs=[
            pl.BlockSpec((bm, k), lambda i, j: (i, 0)),
            pl.BlockSpec((1, k), lambda i, j: (0, 0)),
            pl.BlockSpec((1, k), lambda i, j: (0, 0)),
            pl.BlockSpec((k, bn), lambda i, j: (0, j)),
            pl.BlockSpec((1, bn), lambda i, j: (0, j)),
        ],
        out_specs=pl.BlockSpec((bm, bn), lambda i, j: (i, j)),
        scratch_shapes=[pltpu.VMEM((bm, k), ACT_DTYPE)],
        compiler_params=pltpu.CompilerParams(
            dimension_semantics=("parallel", "arbitrary"),
            vmem_limit_bytes=VMEM_LIMIT),
    )(x, ln_w.reshape(1, k).astype(jnp.float32),
      ln_b.reshape(1, k).astype(jnp.float32),
      w, bias.reshape(1, n).astype(jnp.float32))
    return out[:m] if m_pad != m else out


def _mm_kernel(*refs, activation, has_residual, k_steps):
    """K-tiled matmul with f32 accumulator, fused bias / GELU / residual."""
    if has_residual:
        x_ref, w_ref, b_ref, r_ref, o_ref, acc_ref = refs
    else:
        x_ref, w_ref, b_ref, o_ref, acc_ref = refs
        r_ref = None
    ki = pl.program_id(2)

    @pl.when(ki == 0)
    def _init():
        acc_ref[...] = jnp.zeros_like(acc_ref)

    acc_ref[...] += jnp.dot(x_ref[...], w_ref[...],
                            preferred_element_type=jnp.float32)

    @pl.when(ki == k_steps - 1)
    def _finish():
        acc = acc_ref[...] + b_ref[...]
        if activation == "gelu":
            acc = _gelu_exact(acc)
        if has_residual:
            acc = acc + r_ref[...].astype(jnp.float32)
        o_ref[...] = acc.astype(o_ref.dtype)


def matmul_bias(x, w, bias, residual=None, activation="none", out_dtype=None):
    """y = activation(x @ w + bias) [+ residual], tiled (M, N, K)."""
    m, k = x.shape
    n = w.shape[1]
    out_dtype = out_dtype or ACT_DTYPE
    m_pad = _round_up(m, 8)
    x = _pad_rows(x.astype(w.dtype), m_pad)
    has_res = residual is not None
    if has_res:
        residual = _pad_rows(residual, m_pad)
    bm = _pick_bm(m_pad)
    bn = _pick_bn(n, _MM_BN_CAP)
    bk = _pick_bn(k, _MM_BK_CAP)
    k_steps = k // bk
    in_specs = [
        pl.BlockSpec((bm, bk), lambda i, j, kk: (i, kk)),
        pl.BlockSpec((bk, bn), lambda i, j, kk: (kk, j)),
        pl.BlockSpec((1, bn), lambda i, j, kk: (0, j)),
    ]
    args = [x, w, bias.reshape(1, n).astype(jnp.float32)]
    if has_res:
        in_specs.append(pl.BlockSpec((bm, bn), lambda i, j, kk: (i, j)))
        args.append(residual)
    out = pl.pallas_call(
        functools.partial(_mm_kernel, activation=activation,
                          has_residual=has_res, k_steps=k_steps),
        out_shape=jax.ShapeDtypeStruct((m_pad, n), out_dtype),
        grid=(m_pad // bm, n // bn, k_steps),
        in_specs=in_specs,
        out_specs=pl.BlockSpec((bm, bn), lambda i, j, kk: (i, j)),
        scratch_shapes=[pltpu.VMEM((bm, bn), jnp.float32)],
        compiler_params=pltpu.CompilerParams(
            dimension_semantics=("parallel", "parallel", "arbitrary"),
            vmem_limit_bytes=VMEM_LIMIT),
    )(*args)
    return out[:m] if m_pad != m else out


def _layernorm_kernel(x_ref, g_ref, b_ref, o_ref, *, eps):
    x = x_ref[...].astype(jnp.float32)
    mean = jnp.mean(x, axis=-1, keepdims=True)
    xc = x - mean
    var = jnp.mean(xc * xc, axis=-1, keepdims=True)
    y = xc * jax.lax.rsqrt(var + eps)
    o_ref[...] = (y * g_ref[...] + b_ref[...]).astype(o_ref.dtype)


def layernorm(x2d, gamma, beta, eps=1e-5, out_dtype=None):
    m, d = x2d.shape
    out_dtype = out_dtype or ACT_DTYPE
    m_pad = _round_up(m, 8)
    x2d = _pad_rows(x2d, m_pad)
    bm = _pick_bm(m_pad)
    out = pl.pallas_call(
        functools.partial(_layernorm_kernel, eps=eps),
        out_shape=jax.ShapeDtypeStruct((m_pad, d), out_dtype),
        grid=(m_pad // bm,),
        in_specs=[
            pl.BlockSpec((bm, d), lambda i: (i, 0)),
            pl.BlockSpec((1, d), lambda i: (0, 0)),
            pl.BlockSpec((1, d), lambda i: (0, 0)),
        ],
        out_specs=pl.BlockSpec((bm, d), lambda i: (i, 0)),
        compiler_params=pltpu.CompilerParams(
            dimension_semantics=("parallel",), vmem_limit_bytes=VMEM_LIMIT),
    )(x2d, gamma.reshape(1, d).astype(jnp.float32),
      beta.reshape(1, d).astype(jnp.float32))
    return out[:m] if m_pad != m else out


def _flash_kernel(q_ref, k_ref, v_ref, o_ref, m_scr, l_scr, acc_scr, *,
                  scale, s_valid, s_pad, skv, kv_steps):
    """Online-softmax attention; one (batch, head, q-tile) per grid point."""
    kvi = pl.program_id(3)

    @pl.when(kvi == 0)
    def _init():
        m_scr[...] = jnp.full_like(m_scr, -1e30)
        l_scr[...] = jnp.zeros_like(l_scr)
        acc_scr[...] = jnp.zeros_like(acc_scr)

    q = q_ref[0, 0]                                  # (sq, hd)
    k = k_ref[0, 0]                                  # (skv, hd)
    v = v_ref[0, 0]
    s = jax.lax.dot_general(q, k, (((1,), (1,)), ((), ())),
                            preferred_element_type=jnp.float32) * scale
    if s_valid < s_pad:                              # single mask per kv step
        col = jax.lax.broadcasted_iota(jnp.int32, s.shape, 1) + kvi * skv
        s = jnp.where(col < s_valid, s, -1e30)

    m_prev = m_scr[...]
    m_new = jnp.maximum(m_prev, jnp.max(s, axis=-1, keepdims=True))
    alpha = jnp.exp(m_prev - m_new)
    p = jnp.exp(s - m_new)
    l_scr[...] = alpha * l_scr[...] + jnp.sum(p, axis=-1, keepdims=True)
    acc_scr[...] = alpha * acc_scr[...] + jax.lax.dot_general(
        p.astype(v.dtype), v, (((1,), (0,)), ((), ())),
        preferred_element_type=jnp.float32)
    m_scr[...] = m_new

    @pl.when(kvi == kv_steps - 1)
    def _finish():
        inv = pl.reciprocal(l_scr[...], approx=True)
        o_ref[0, 0] = (acc_scr[...] * inv).astype(o_ref.dtype)


def flash_attention(qkv, n_heads, s_valid, out_dtype=None):
    """qkv: (b, s_pad, 3*d) fused projection -> (b, s_pad, d) attention output."""
    b, s_pad, d3 = qkv.shape
    d = d3 // 3
    hd = d // n_heads
    scale = hd ** -0.5
    out_dtype = out_dtype or ACT_DTYPE

    # One host-side HBM pass: split fused QKV and lay heads out as a leading
    # (parallel-grid) axis so kernel fetches are hd-wide, not 3d-wide.
    qkv5 = jnp.transpose(qkv.reshape(b, s_pad, 3, n_heads, hd), (2, 0, 3, 1, 4))
    q, k, v = qkv5[0], qkv5[1], qkv5[2]              # each (b, n_heads, s_pad, hd)

    tile = _attn_tile(s_pad)
    sq = skv = tile
    kv_steps = s_pad // skv
    kern = functools.partial(_flash_kernel, scale=scale, s_valid=s_valid,
                             s_pad=s_pad, skv=skv, kv_steps=kv_steps)
    out = pl.pallas_call(
        kern,
        out_shape=jax.ShapeDtypeStruct((b, n_heads, s_pad, hd), out_dtype),
        grid=(b, n_heads, s_pad // sq, kv_steps),
        in_specs=[
            pl.BlockSpec((1, 1, sq, hd), lambda bi, hi, qi, ki: (bi, hi, qi, 0)),
            pl.BlockSpec((1, 1, skv, hd), lambda bi, hi, qi, ki: (bi, hi, ki, 0)),
            pl.BlockSpec((1, 1, skv, hd), lambda bi, hi, qi, ki: (bi, hi, ki, 0)),
        ],
        out_specs=pl.BlockSpec((1, 1, sq, hd),
                               lambda bi, hi, qi, ki: (bi, hi, qi, 0)),
        scratch_shapes=[
            pltpu.VMEM((sq, 1), jnp.float32),
            pltpu.VMEM((sq, 1), jnp.float32),
            pltpu.VMEM((sq, hd), jnp.float32),
        ],
        compiler_params=pltpu.CompilerParams(
            dimension_semantics=("parallel", "parallel", "parallel",
                                 "arbitrary"),
            vmem_limit_bytes=VMEM_LIMIT),
    )(q, k, v)
    # (b, n_heads, s_pad, hd) -> (b, s_pad, d): head-contiguous for the proj.
    return jnp.transpose(out, (0, 2, 1, 3)).reshape(b, s_pad, d)


def _resize_kernel(rh_ref, rwt_ref, dec_ref, o_ref):
    # One lane-dense (row_tile, 768) slab per (plane, row-tile) grid step.
    tmp = jnp.dot(dec_ref[0], rwt_ref[...],
                  preferred_element_type=jnp.float32).astype(ACT_DTYPE)
    o_ref[0] = jnp.dot(rh_ref[...], tmp,
                       preferred_element_type=jnp.float32).astype(o_ref.dtype)


def _bilinear_matrix(in_size, out_size):
    # PyTorch F.interpolate bilinear, align_corners=False (half-pixel centers).
    o = jnp.arange(out_size, dtype=jnp.float32)
    src = (o + 0.5) * (in_size / out_size) - 0.5
    src = jnp.maximum(src, 0.0)
    i0 = jnp.minimum(jnp.floor(src).astype(jnp.int32), in_size - 1)
    i1 = jnp.minimum(i0 + 1, in_size - 1)
    w1 = src - i0.astype(jnp.float32)
    w0 = 1.0 - w1
    r = (w0[:, None] * jax.nn.one_hot(i0, in_size, dtype=jnp.float32)
         + w1[:, None] * jax.nn.one_hot(i1, in_size, dtype=jnp.float32))
    return r  # (out_size, in_size)


def bilinear_upsample(dec, out_size=_RESIZE_OUT):
    """dec: (b*n_cls, gh, gw) -> (b*n_cls, out_size, out_size) f32 (bf16 MXU)."""
    bc, gh, gw = dec.shape
    rh = _bilinear_matrix(gh, out_size).astype(ACT_DTYPE)        # (768, gh)
    rwt = _bilinear_matrix(gw, out_size).T.astype(ACT_DTYPE)     # (gw, 768)
    row = _RESIZE_ROW_TILE
    return pl.pallas_call(
        _resize_kernel,
        out_shape=jax.ShapeDtypeStruct((bc, out_size, out_size), jnp.float32),
        grid=(bc, out_size // row),
        in_specs=[
            pl.BlockSpec((row, gh), lambda i, r: (r, 0)),
            pl.BlockSpec((gw, out_size), lambda i, r: (0, 0)),
            pl.BlockSpec((1, gh, gw), lambda i, r: (i, 0, 0)),
        ],
        out_specs=pl.BlockSpec((1, row, out_size), lambda i, r: (i, r, 0)),
        compiler_params=pltpu.CompilerParams(
            dimension_semantics=("parallel", "parallel"),
            vmem_limit_bytes=VMEM_LIMIT),
    )(rh, rwt, dec.astype(ACT_DTYPE))


# ----------------------------- model pieces -----------------------------

def block_forward(x, p, n_heads, s_valid):
    """Pre-LN transformer block; LN/bias/GELU/residual fused into the matmuls."""
    b, s_pad, d = x.shape
    x2 = x.reshape(b * s_pad, d)
    qkv = ln_matmul(x2, p["ln1_w"], p["ln1_b"], p["qkv_w"], p["qkv_b"])
    attn = flash_attention(qkv.reshape(b, s_pad, 3 * d), n_heads, s_valid)
    x2 = matmul_bias(attn.reshape(b * s_pad, d), p["proj_w"], p["proj_b"],
                     residual=x2)
    h1 = ln_matmul(x2, p["ln2_w"], p["ln2_b"], p["fc1_w"], p["fc1_b"],
                   activation="gelu")
    x2 = matmul_bias(h1, p["fc2_w"], p["fc2_b"], residual=x2)
    return x2.reshape(b, s_pad, d)


def vit_encoder_forward(p, img, patch_size, n_heads):
    """img: (b, c, h, w) NCHW -> normed token sequence (b, 1 + gh*gw, d)."""
    b, c, h, w = img.shape
    gh, gw = h // patch_size, w // patch_size
    d = p["patch_w"].shape[1]
    # patch-embed conv (kernel=stride=P) == unfold patches + matmul
    xp = img.reshape(b, c, gh, patch_size, gw, patch_size)
    xp = jnp.transpose(xp, (0, 2, 4, 1, 3, 5)).reshape(
        b * gh * gw, c * patch_size * patch_size)
    tok = matmul_bias(xp, p["patch_w"], p["patch_b"]).reshape(b, gh * gw, d)
    cls = jnp.broadcast_to(p["cls_token"], (b, 1, d)).astype(ACT_DTYPE)
    x = jnp.concatenate([cls, tok], axis=1) + p["pos_embed"].astype(ACT_DTYPE)
    s = x.shape[1]
    x, s_pad = pad_seq(x)
    for bp in p["blocks"]:
        x = block_forward(x, bp, n_heads, s_valid=s)
    xn = layernorm(x.reshape(b * s_pad, d), p["norm_w"], p["norm_b"])
    return xn.reshape(b, s_pad, d)[:, :s]


def decode_and_upsample(params, tokens, gs, apply_norm):
    """tokens: (b, gs*gs, d) -> masks (b, n_cls, 768, 768)."""
    b, n, d = tokens.shape
    n_cls = params["n_cls"]
    ncp = params["dec_w"].shape[1]
    x2 = tokens.reshape(b * n, d)
    if apply_norm:
        y = ln_matmul(x2, params["norm_w"], params["norm_b"],
                      params["dec_w"], params["dec_b"])
    else:
        y = matmul_bias(x2, params["dec_w"], params["dec_b"])
    # Decoder logits stay bf16 through the transpose (half the HBM traffic);
    # the resize kernel accumulates in f32.
    y = y.reshape(b, gs, n // gs, ncp)
    dec = jnp.transpose(y, (0, 3, 1, 2))[:, :n_cls]          # (b, n_cls, gs, gw)
    masks = bilinear_upsample(dec.reshape(b * n_cls, gs, n // gs))
    return masks.reshape(b, n_cls, _RESIZE_OUT, _RESIZE_OUT)


def video_transformer_forward(params, images, cfg):
    """images: (b, t, c, h, w). Returns list of masks (b, n_cls, 768, 768)."""
    b, t, c, h, w = images.shape
    patch_size = cfg["patch_size"]
    n_heads = cfg["n_heads"]
    d_model = cfg["d_model"]
    gs = h // patch_size
    images_t = jnp.transpose(images, (1, 0, 2, 3, 4))        # t b c h w
    segmented_output = []
    vit_encoderoutput = []
    for i in range(t):
        x = vit_encoder_forward(params["vit"], images_t[i], patch_size, n_heads)
        n_tok = x.shape[1]
        if i == 0:
            masks = decode_and_upsample(params, x[:, 1:], gs, apply_norm=False)
        else:
            ve = jnp.stack(vit_encoderoutput, axis=1)        # (b, i, n_tok, d)
            # TODO(synk): reference re-creates temporal_token as a fresh randn
            # Parameter every frame; we mirror that with a deterministic sample.
            tt_key = jax.random.fold_in(params["tt_key"], i)
            temporal_token = jax.random.normal(tt_key, (1, i, 1, d_model),
                                               jnp.float32)
            ve = (ve + temporal_token.astype(ve.dtype)).reshape(
                b, i * n_tok, d_model)
            s1 = ve.shape[1]
            ve, _ = pad_seq(ve)
            for bp in params["blocks"]:                      # spatio-temporal
                ve = block_forward(ve, bp, n_heads, s_valid=s1)
            sp = ve[:, :n_tok]                               # temporal slot 0
            corr = jnp.concatenate([sp, x], axis=1)          # (b, 2*n_tok, d)
            s2 = corr.shape[1]
            corr, _ = pad_seq(corr)
            for bp in params["blocks"]:                      # corrector (shared)
                corr = block_forward(corr, bp, n_heads, s_valid=s2)
            dec_tokens = corr[:, 1:n_tok]                    # drop cls, keep slot 0
            masks = decode_and_upsample(params, dec_tokens, gs, apply_norm=True)
        segmented_output.append(masks)
        vit_encoderoutput.append(x)
    return segmented_output


# ----------------------------- parameter init -----------------------------

def _init_block(key, d, d_ff):
    ks = jax.random.split(key, 4)
    f32, cd = jnp.float32, ACT_DTYPE
    return dict(
        ln1_w=jnp.ones((d,), f32), ln1_b=jnp.zeros((d,), f32),
        qkv_w=(0.02 * jax.random.normal(ks[0], (d, 3 * d), f32)).astype(cd),
        qkv_b=jnp.zeros((3 * d,), f32),
        proj_w=(0.02 * jax.random.normal(ks[1], (d, d), f32)).astype(cd),
        proj_b=jnp.zeros((d,), f32),
        ln2_w=jnp.ones((d,), f32), ln2_b=jnp.zeros((d,), f32),
        fc1_w=(0.02 * jax.random.normal(ks[2], (d, d_ff), f32)).astype(cd),
        fc1_b=jnp.zeros((d_ff,), f32),
        fc2_w=(0.02 * jax.random.normal(ks[3], (d_ff, d), f32)).astype(cd),
        fc2_b=jnp.zeros((d,), f32),
    )


def init_params(key, cfg):
    f32 = jnp.float32
    d, dff = cfg["d_model"], cfg["d_ff"]
    P, C = cfg["patch_size"], cfg["channels"]
    n_patches = (cfg["image_size"] // P) ** 2
    nl = cfg["n_layers"]
    n_cls = cfg["n_cls"]
    ncp = _round_up(n_cls, 128)            # lane-dense (padded) decoder head
    keys = jax.random.split(key, 5 + 2 * nl)
    vit = dict(
        patch_w=(0.02 * jax.random.normal(keys[0], (C * P * P, d), f32)
                 ).astype(ACT_DTYPE),
        patch_b=jnp.zeros((d,), f32),
        cls_token=0.02 * jax.random.normal(keys[1], (1, 1, d), f32),
        pos_embed=0.02 * jax.random.normal(keys[2], (1, n_patches + 1, d), f32),
        blocks=[_init_block(keys[5 + l], d, dff) for l in range(nl)],
        norm_w=jnp.ones((d,), f32),
        norm_b=jnp.zeros((d,), f32),
    )
    dec_w = jnp.zeros((d, ncp), f32).at[:, :n_cls].set(
        0.02 * jax.random.normal(keys[3], (d, n_cls), f32))
    return dict(
        vit=vit,
        blocks=[_init_block(keys[5 + nl + l], d, dff) for l in range(nl)],
        norm_w=jnp.ones((d,), f32),
        norm_b=jnp.zeros((d,), f32),
        dec_w=dec_w.astype(ACT_DTYPE),
        dec_b=jnp.zeros((ncp,), f32),
        n_cls=n_cls,
        tt_key=keys[4],
    )


# ----------------------------- main -----------------------------

if __name__ == "__main__":
    cfg = dict(image_size=16, patch_size=8, num_images=2, n_layers=2,
               d_model=32, d_ff=64, n_heads=4, n_cls=4, channels=3)
    B, T = 2, 2

    key = jax.random.PRNGKey(0)
    kp, kx = jax.random.split(key)
    params = init_params(kp, cfg)
    images = jax.random.normal(
        kx, (B, T, cfg["channels"], cfg["image_size"], cfg["image_size"]),
        jnp.float32)

    outs = video_transformer_forward(params, images, cfg)
    for o in outs:
        jax.block_until_ready(o)

    assert len(outs) == T
    for o in outs:
        assert o.shape == (B, cfg["n_cls"], 768, 768), o.shape
        assert o.dtype == jnp.float32
        assert bool(jnp.isfinite(o).all())
    print("KERNEL_OK")
</pallas_src>

<mosaic_0001>
module attributes {stable_mosaic.version = 11 : i64} {
  func.func @_mm_kernel(%arg0: i32, %arg1: i32, %arg2: i32, %arg3: memref<8x192xbf16, #tpu.memory_space<vmem>>, %arg4: memref<192x32xbf16, #tpu.memory_space<vmem>>, %arg5: memref<1x32xf32, #tpu.memory_space<vmem>>, %arg6: memref<8x32xbf16, #tpu.memory_space<vmem>>, %arg7: memref<8x32xf32, #tpu.memory_space<vmem>>) attributes {dimension_semantics = [#tpu.dimension_semantics<parallel>, #tpu.dimension_semantics<parallel>, #tpu.dimension_semantics<arbitrary>], iteration_bounds = array<i64: 1, 1, 1>, scalar_prefetch = 0 : i64, scratch_operands = 1 : i64, tpu.core_type = #tpu.core_type<tc>, window_params = [{transform_indices = @transform_0, window_bounds = array<i64: 8, 192>}, {transform_indices = @transform_1, window_bounds = array<i64: 192, 32>}, {transform_indices = @transform_2, window_bounds = array<i64: 1, 32>}, {transform_indices = @transform_3, window_bounds = array<i64: 8, 32>}]} {
    %c0_i32 = arith.constant 0 : i32
    %0 = arith.cmpi eq, %arg2, %c0_i32 : i32
    %1 = arith.extui %0 : i1 to i32
    %c0_i32_0 = arith.constant 0 : i32
    %2 = arith.cmpi ne, %1, %c0_i32_0 : i32
    scf.if %2 {
      %cst_10 = arith.constant 0.000000e+00 : f32
      %12 = vector.broadcast %cst_10 : f32 to vector<8x32xf32>
      %c0_11 = arith.constant 0 : index
      %c0_12 = arith.constant 0 : index
      %13 = vector.load %arg7[%c0_11, %c0_12] : memref<8x32xf32, #tpu.memory_space<vmem>>, vector<8x32xf32>
      tpu.vector_store %arg7[%c0_11, %c0_12], %12 {strides = array<i32>} : memref<8x32xf32, #tpu.memory_space<vmem>>, vector<8x32xf32>,
    } else {
    }
    %c0 = arith.constant 0 : index
    %c0_1 = arith.constant 0 : index
    %3 = vector.load %arg7[%c0, %c0_1] : memref<8x32xf32, #tpu.memory_space<vmem>>, vector<8x32xf32>
    %c0_2 = arith.constant 0 : index
    %c0_3 = arith.constant 0 : index
    %4 = vector.load %arg3[%c0_2, %c0_3] : memref<8x192xbf16, #tpu.memory_space<vmem>>, vector<8x192xbf16>
    %c0_4 = arith.constant 0 : index
    %c0_5 = arith.constant 0 : index
    %5 = vector.load %arg4[%c0_4, %c0_5] : memref<192x32xbf16, #tpu.memory_space<vmem>>, vector<192x32xbf16>
    %cst = arith.constant dense<0.000000e+00> : vector<8x32xf32>
    %6 = tpu.matmul %4, %5, %cst {dimension_numbers = #tpu.dot_dimension_numbers<[1], [0], [0], [1], [0, 0, 1, 1], [], []>} : vector<8x192xbf16>, vector<192x32xbf16>, vector<8x32xf32> -> vector<8x32xf32>
    %7 = arith.addf %3, %6 : vector<8x32xf32>
    %c0_6 = arith.constant 0 : index
    %c0_7 = arith.constant 0 : index
    %8 = vector.load %arg7[%c0_6, %c0_7] : memref<8x32xf32, #tpu.memory_space<vmem>>, vector<8x32xf32>
    tpu.vector_store %arg7[%c0_6, %c0_7], %7 {strides = array<i32>} : memref<8x32xf32, #tpu.memory_space<vmem>>, vector<8x32xf32>,
    %c0_i32_8 = arith.constant 0 : i32
    %9 = arith.cmpi eq, %arg2, %c0_i32_8 : i32
    %10 = arith.extui %9 : i1 to i32
    %c0_i32_9 = arith.constant 0 : i32
    %11 = arith.cmpi ne, %10, %c0_i32_9 : i32
    scf.if %11 {
      %c0_10 = arith.constant 0 : index
      %c0_11 = arith.constant 0 : index
      %12 = vector.load %arg7[%c0_10, %c0_11] : memref<8x32xf32, #tpu.memory_space<vmem>>, vector<8x32xf32>
      %c0_12 = arith.constant 0 : index
      %c0_13 = arith.constant 0 : index
      %13 = vector.load %arg5[%c0_12, %c0_13] : memref<1x32xf32, #tpu.memory_space<vmem>>, vector<1x32xf32>
      %14 = vector.broadcast %13 : vector<1x32xf32> to vector<8x32xf32>
      %15 = arith.addf %12, %14 : vector<8x32xf32>
      %16 = arith.truncf %15 : vector<8x32xf32> to vector<8x32xbf16>
      %c0_14 = arith.constant 0 : index
      %c0_15 = arith.constant 0 : index
      %17 = vector.load %arg6[%c0_14, %c0_15] : memref<8x32xbf16, #tpu.memory_space<vmem>>, vector<8x32xbf16>
      tpu.vector_store %arg6[%c0_14, %c0_15], %16 {strides = array<i32>} : memref<8x32xbf16, #tpu.memory_space<vmem>>, vector<8x32xbf16>,
    } else {
    }
    return
  }
  func.func @transform_0(%arg0: i32, %arg1: i32, %arg2: i32) -> (i32, i32) {
    %c0_i32 = arith.constant 0 : i32
    return %arg0, %arg2 : i32, i32
  }
  func.func @transform_1(%arg0: i32, %arg1: i32, %arg2: i32) -> (i32, i32) {
    %c0_i32 = arith.constant 0 : i32
    return %arg2, %arg1 : i32, i32
  }
  func.func @transform_2(%arg0: i32, %arg1: i32, %arg2: i32) -> (i32, i32) {
    %c0_i32 = arith.constant 0 : i32
    %c0_i32_0 = arith.constant 0 : i32
    return %c0_i32, %arg1 : i32, i32
  }
  func.func @transform_3(%arg0: i32, %arg1: i32, %arg2: i32) -> (i32, i32) {
    %c0_i32 = arith.constant 0 : i32
    return %arg0, %arg1 : i32, i32
  }
}

</mosaic_0001>

<llo_original>
// kernel: tpu_custom_call.1
$region0: #{tpu_custom_call.1}
  #allocation0 [shape = 'u32[]', space=smem, size = 0x4, offset = 0x4, fixed_abs, tag = 'smem constant byte address 0x4 - core index']
  #allocation1 [shape = 'u32[144,128]{1,0:T(1,128)}', space=vmem, size = 0x12000, scoped, tag = 'internal scratch']
  #allocation2 [shape = 'f32[8,32]{1,0:T(8,128)}', space=vmem, size = 0x1000, scoped, tag = 'scratch operand']
  %s0 = inlined_call_operand.vmem [shape: bf16[8,192], index: 0, kind: input, shape index: {}]
  %s1 = inlined_call_operand.vmem [shape: bf16[192,32], index: 1, kind: input, shape index: {}]
  %s2 = inlined_call_operand.vmem [shape: f32[1,32], index: 2, kind: input, shape index: {}]
  %s3 = inlined_call_operand.hbm [shape: bf16[8,32], index: 3, kind: output, shape index: {}]
  %s4 = sld [smem:[#allocation0]]
  $region30: #{tpu_custom_call.1} parent=0
    _
  %s6 = ssub.s32 1, %s4
  %s7 = scalar_select 0, %s6, %s4
  $region1: #{tpu_custom_call.1} parent=0
    #allocation3 [shape = 'u8[2048]{0}', space=vmem, size = 0x800, scoped, tag = 'output window, operand 0, single buffered']
    #allocation4 [shape = 's32[1]{0}', space=sflag, size = 0x4, scoped, tag = 'scoped memory for tpu_custom_call.1']
    %8 = vsyncpa [#allocation4], 0
    // Predicated region
    $region2: #{tpu_custom_call.1} parent=1 // pred_check
      _
    $region3: #{tpu_custom_call.1} parent=1 // pred_check_branch
      %10 = sbr.rel (0) target = $region5
    $region4: #{tpu_custom_call.1} parent=1 // pred_region
      _
    $region5: #{tpu_custom_call.1} parent=1 // pred_fallthru
      _
    // Predicated region
    $region6: #{tpu_custom_call.1} parent=1 // pred_check
      _
    $region7: #{tpu_custom_call.1} parent=1 // pred_check_branch
      %12 = sbr.rel (0) target = $region9
    $region8: #{tpu_custom_call.1} parent=1 // pred_region
      _
    $region9: #{tpu_custom_call.1} parent=1 // pred_fallthru
      _
    // Predicated region
    $region10: #{tpu_custom_call.1} parent=1 // pred_check
      _
    $region11: #{tpu_custom_call.1} parent=1 // pred_check_branch
      %14 = sbr.rel (0) target = $region13
    $region12: #{tpu_custom_call.1} parent=1 // pred_region
      _
    $region13: #{tpu_custom_call.1} parent=1 // pred_fallthru
      _
    %p16 = scmp.eq.s32.totalorder 0, 0
    // Predicated region
    $region14: #{tpu_custom_call.1} parent=1 // pred_check
      %p17 = pneg %p16
    $region15: #{tpu_custom_call.1} parent=1 // pred_check_branch
      %19 = sbr.rel (%p17) target = $region17
    $region16: #{tpu_custom_call.1} parent=1 // pred_region
      %vm20 = vcmask 261120
      %21 = vst.msk [vmem:[#allocation2] sm:$0xff] %vm20, 0.0
    $region17: #{tpu_custom_call.1} parent=1 // pred_fallthru
      _
    %v22 = vld [vmem:[#allocation2] sm:$0xff]
    %v23 = vld [vmem:[%s0] sm:$0xff]
    %v24 = vld [vmem:[%s1] sm:$0xf]
    %v25 = vld [vmem:[%s1 + $0x4] sm:$0xf]
    %v26 = vld [vmem:[%s1 + $0x8] sm:$0xf]
    %v27 = vld [vmem:[%s1 + $0xc] sm:$0xf]
    %v28 = vld [vmem:[%s1 + $0x10] sm:$0xf]
    %v29 = vld [vmem:[%s1 + $0x14] sm:$0xf]
    %v30 = vld [vmem:[%s1 + $0x18] sm:$0xf]
    %v31 = vld [vmem:[%s1 + $0x1c] sm:$0xf]
    %v32 = vld [vmem:[%s1 + $0x20] sm:$0xf]
    %v33 = vld [vmem:[%s1 + $0x24] sm:$0xf]
    %v34 = vld [vmem:[%s1 + $0x28] sm:$0xf]
    %v35 = vld [vmem:[%s1 + $0x2c] sm:$0xf]
    %v36 = vld [vmem:[%s1 + $0x30] sm:$0xf]
    %v37 = vld [vmem:[%s1 + $0x34] sm:$0xf]
    %v38 = vld [vmem:[%s1 + $0x38] sm:$0xf]
    %v39 = vld [vmem:[%s1 + $0x3c] sm:$0xf]
    %v40 = vld [vmem:[%s1 + $0x40] sm:$0xf]
    %v41 = vld [vmem:[%s1 + $0x44] sm:$0xf]
    %v42 = vld [vmem:[%s1 + $0x48] sm:$0xf]
    %v43 = vld [vmem:[%s1 + $0x4c] sm:$0xf]
    %v44 = vld [vmem:[%s1 + $0x50] sm:$0xf]
    %v45 = vld [vmem:[%s1 + $0x54] sm:$0xf]
    %v46 = vld [vmem:[%s1 + $0x58] sm:$0xf]
    %v47 = vld [vmem:[%s1 + $0x5c] sm:$0xf]
    %v49 = vunpack.c.l.b16 %v23
    %v50 = vunpack.c.h.b16 %v23
    %v51 = vpack.c.b16 %v49, %v49
    %v52 = vpack.c.b16 %v50, %v50
    %v78 = vunpack.c.l.b16 %v24
    %v79 = vunpack.c.l.b16 %v25
    %v80 = vunpack.c.l.b16 %v26
    %v81 = vunpack.c.l.b16 %v27
    %v82 = vunpack.c.l.b16 %v28
    %v83 = vunpack.c.l.b16 %v29
    %v84 = vunpack.c.l.b16 %v30
    %v85 = vunpack.c.l.b16 %v31
    %v86 = vunpack.c.l.b16 %v32
    %v87 = vunpack.c.l.b16 %v33
    %v88 = vunpack.c.l.b16 %v34
    %v89 = vunpack.c.l.b16 %v35
    %v90 = vunpack.c.l.b16 %v36
    %v91 = vunpack.c.l.b16 %v37
    %v92 = vunpack.c.l.b16 %v38
    %v93 = vunpack.c.l.b16 %v39
    %v94 = vunpack.c.l.b16 %v40
    %v95 = vunpack.c.l.b16 %v41
    %v96 = vunpack.c.l.b16 %v42
    %v97 = vunpack.c.l.b16 %v43
    %v98 = vunpack.c.l.b16 %v44
    %v99 = vunpack.c.l.b16 %v45
    %v100 = vunpack.c.l.b16 %v46
    %v101 = vunpack.c.l.b16 %v47
    %v102 = vpack.c.b16 %v79, %v78
    %v103 = vpack.c.b16 %v81, %v80
    %v104 = vpack.c.b16 %v83, %v82
    %v105 = vpack.c.b16 %v85, %v84
    %v106 = vpack.c.b16 %v87, %v86
    %v107 = vpack.c.b16 %v89, %v88
    %v108 = vpack.c.b16 %v91, %v90
    %v109 = vpack.c.b16 %v93, %v92
    %v110 = vpack.c.b16 %v95, %v94
    %v111 = vpack.c.b16 %v97, %v96
    %v112 = vpack.c.b16 %v99, %v98
    %v113 = vpack.c.b16 %v101, %v100
    %vm126 = vcmask 523264
    %v128 = vsel %vm126, %v52, 0
    %130 = vmatprep.subr.bf16.mxu0 0
    %131 = vmatpush1.bf16.msra.mxu0 %v102
    %132 = vmatprep.subr.bf16.mxu0 0
    %133 = vmatpush1.bf16.msra.mxu0 %v103
    %134 = vmatprep.subr.bf16.mxu0 0
    %135 = vmatpush1.bf16.msra.mxu0 %v104
    %136 = vmatprep.subr.bf16.mxu0 0
    %137 = vmatpush1.bf16.msra.mxu0 %v105
    %138 = vmatprep.subr.bf16.mxu0 0
    %139 = vmatpush1.bf16.msra.mxu0 %v106
    %140 = vmatprep.subr.bf16.mxu0 0
    %141 = vmatpush1.bf16.msra.mxu0 %v107
    %142 = vmatprep.subr.bf16.mxu0 0
    %143 = vmatpush1.bf16.msra.mxu0 %v108
    %144 = vmatprep.subr.bf16.mxu0 0
    %145 = vmatpush1.bf16.msra.mxu0 %v109
    %146 = vmatprep.subr.bf16.mxu0 0
    %147 = vmatpush1.bf16.msra.mxu0 %v110
    %148 = vmatprep.subr.bf16.mxu0 0
    %149 = vmatpush1.bf16.msra.mxu0 %v111
    %150 = vmatprep.subr.bf16.mxu0 0
    %151 = vmatpush1.bf16.msra.mxu0 %v112
    %152 = vmatprep.subr.bf16.mxu0 0
    %153 = vmatpush1.bf16.msra.mxu0 %v113
    %154 = vmatprep.subr.bf16.mxu0 0
    %155 = vmatpush1.bf16.msra.mxu0 0
    %156 = vmatprep.subr.bf16.mxu0 0
    %157 = vmatpush1.bf16.msra.mxu0 0
    %158 = vmatprep.subr.bf16.mxu0 0
    %159 = vmatpush1.bf16.msra.mxu0 0
    %160 = vmatprep.subr.bf16.mxu0 0
    %161 = vmatpush1.bf16.msra.mxu0 0
    %162 = vmatprep.mubr.bf16.mxu0 %v128
    %163 = vmatmul.mubr.bf16.gmra.mrb[0].mxu0 %v51
    %v164 = vpop.f32.mrb[0].mxu0
    %v165 = vadd.f32 0.0, %v164
    %v166 = vpop.f32.mrb[0].mxu0
    %v167 = vpop.f32.mrb[0].mxu0
    %v168 = vpop.f32.mrb[0].mxu0
    %169 = vdwg.mxu0
    %v170 = vadd.f32 %v22, %v165
    %vm171 = vcmask 261120
    %172 = vst.msk [vmem:[#allocation2] sm:$0xff] %vm171, %v170
    // Predicated region
    $region18: #{tpu_custom_call.1} parent=1 // pred_check
      %p173 = pneg %p16
    $region19: #{tpu_custom_call.1} parent=1 // pred_check_branch
      %175 = sbr.rel (%p173) target = $region21
    $region20: #{tpu_custom_call.1} parent=1 // pred_region
      %v176 = vld [vmem:[#allocation2] sm:$0xff]
      %v177 = vld [vmem:[%s2] sm:$0x1]
      %v179 = vlaneseq
      %v180 = vshrl.u32 %v179, 7
      %v181 = vsub.s32 0, %v180
      %v182 = vrot.slane %v177, %v181
      %v184 = vadd.f32 %v176, %v182
      %v185 = vpack.c.bf16 %v184, %v184
      %vm186 = vcmask 257024
      %187 = vst.msk [vmem:[#allocation3] sm:$0xf] %vm186, %v185
    $region21: #{tpu_custom_call.1} parent=1 // pred_fallthru
      _
    // Predicated region
    $region22: #{tpu_custom_call.1} parent=1 // pred_check
      _
    $region23: #{tpu_custom_call.1} parent=1 // pred_check_branch
      %189 = sbr.rel (0) target = $region25
    $region24: #{tpu_custom_call.1} parent=1 // pred_region
      %s191 = ssub.s32 64, 64
      %192 = vsyncadd [#allocation4], %s191
      %s194 = sshll.u32 [#allocation3], 4
      %s195 = int_to_ptr.vmem [resolvable:$true] %s194
      %197 = dma.vmem_to_hbm [thread:$0]  %s195, 64, %s3, [#allocation4]
    $region25: #{tpu_custom_call.1} parent=1 // pred_fallthru
      _
    // Predicated region
    $region26: #{tpu_custom_call.1} parent=1 // pred_check
      _
    $region27: #{tpu_custom_call.1} parent=1 // pred_check_branch
      %199 = sbr.rel (0) target = $region29
    $region28: #{tpu_custom_call.1} parent=1 // pred_region
      %200 = dma.done [#allocation4], 64
    $region29: #{tpu_custom_call.1} parent=1 // pred_fallthru
      _
    %201 = vsyncpa [#allocation4], 1

</llo_original>
